<compile_context>
chip_gen: v6e
topology: v6e:2x2x1
jax: 0.10.0
libtpu: 0.0.40
codegen_flags: <defaults>
</compile_context>

<pallas_src>
import functools

import jax
import jax.numpy as jnp
from jax.experimental import pallas as pl
from jax.experimental.pallas import tpu as pltpu


def _round_up(x, m):
    return (x + m - 1) // m * m


def _leaky_relu(x, negative_slope):
    return jnp.where(x >= 0, x, negative_slope * x)


def mlp_kernel(x_ref, w_ref, b_ref, o_ref, *, negative_slope, num_layers):
    """x_ref: (TM, P); w_ref: (L, P, P); b_ref: (L, P); o_ref: (TM, P)."""
    h = x_ref[...]
    for l in range(num_layers):  # static unroll, L = 5
        w = w_ref[l]                       # (P, P), static first-axis index
        b = b_ref[pl.ds(l, 1), :]          # (1, P)
        h = jnp.dot(h, w, preferred_element_type=jnp.float32) + b
        if l < num_layers - 1:
            h = _leaky_relu(h, negative_slope)
    o_ref[...] = h.astype(o_ref.dtype)


def pack_params(params):
    """Zero-pad every layer to a common lane-aligned P x P square and stack.

    params: list of (W [in, out], b [1, out] or [out]) in f32.
    Returns (w_packed [L, P, P], b_packed [L, P], P).
    Padded rows/columns are zero, so padded lanes of every activation stay
    exactly zero through LeakyReLU and do not perturb the real outputs.
    """
    dims = [params[0][0].shape[0]] + [w.shape[1] for w, _ in params]
    P = _round_up(max(dims), 128)
    L = len(params)
    w_packed = jnp.zeros((L, P, P), jnp.float32)
    b_packed = jnp.zeros((L, P), jnp.float32)
    for l, (w, b) in enumerate(params):
        fi, fo = w.shape
        w_packed = w_packed.at[l, :fi, :fo].set(w.astype(jnp.float32))
        b_packed = b_packed.at[l, :fo].set(b.reshape(-1).astype(jnp.float32))
    return w_packed, b_packed, P


def original_net_forward(x, params, negative_slope=0.01, block_batch=512):
    """x: [batch, in_features]; params: list of (W [in, out], b [1, out])."""
    batch, in_features = x.shape
    out_features = params[-1][0].shape[1]
    num_layers = len(params)

    w_packed, b_packed, P = pack_params(params)

    # Batch tile: at least 8 rows (sublane), at most block_batch rows.
    tm = min(_round_up(batch, 8), block_batch)
    padded_batch = _round_up(batch, tm)

    # Lane-dense, zero-padded input slab [padded_batch, P].
    x_pad = jnp.zeros((padded_batch, P), jnp.float32)
    x_pad = x_pad.at[:batch, :in_features].set(x.astype(jnp.float32))

    grid = (padded_batch // tm,)

    flops = 2 * padded_batch * num_layers * P * P
    bytes_accessed = 4 * (x_pad.size + w_packed.size + b_packed.size
                          + padded_batch * P)

    kernel = functools.partial(
        mlp_kernel, negative_slope=negative_slope, num_layers=num_layers)

    out_padded = pl.pallas_call(
        kernel,
        out_shape=jax.ShapeDtypeStruct((padded_batch, P), jnp.float32),
        grid=grid,
        in_specs=[
            # x: tiled over batch, auto double-buffered.
            pl.BlockSpec((tm, P), lambda i: (i, 0)),
            # packed weights: constant block index -> VMEM-resident across grid.
            pl.BlockSpec((num_layers, P, P), lambda i: (0, 0, 0)),
            # packed biases: constant block index -> VMEM-resident across grid.
            pl.BlockSpec((num_layers, P), lambda i: (0, 0)),
        ],
        out_specs=pl.BlockSpec((tm, P), lambda i: (i, 0)),
        compiler_params=pltpu.CompilerParams(
            dimension_semantics=("parallel",)),
        cost_estimate=pl.CostEstimate(
            flops=flops, transcendentals=0, bytes_accessed=bytes_accessed),
    )(x_pad, w_packed, b_packed)

    # Slice back to the real (unpadded) batch and output width.
    return out_padded[:batch, :out_features]


def init_params(key, input_size, hidden_sizes, output_size):
    """Deterministic init mimicking nn.Linear's uniform(-1/sqrt(in), 1/sqrt(in))."""
    dims = [input_size] + list(hidden_sizes) + [output_size]
    params = []
    for i in range(len(dims) - 1):
        fan_in, fan_out = dims[i], dims[i + 1]
        key, kw, kb = jax.random.split(key, 3)
        bound = 1.0 / jnp.sqrt(float(fan_in))
        w = jax.random.uniform(kw, (fan_in, fan_out), jnp.float32, -bound, bound)
        b = jax.random.uniform(kb, (1, fan_out), jnp.float32, -bound, bound)
        params.append((w, b))
    return params


def reference_forward(x, params, negative_slope=0.01):
    h = x
    for i, (w, b) in enumerate(params):
        h = h @ w + b
        if i < len(params) - 1:
            h = jnp.where(h >= 0, h, negative_slope * h)
    return h


if __name__ == "__main__":
    key = jax.random.PRNGKey(0)

    input_size = 16
    hidden_sizes = [32, 32, 32, 32]
    output_size = 8
    batch = 8
    negative_slope = 0.01

    kx, kp = jax.random.split(key)
    x = jax.random.normal(kx, (batch, input_size), jnp.float32)
    params = init_params(kp, input_size, hidden_sizes, output_size)

    out = original_net_forward(x, params, negative_slope)
    out = jax.block_until_ready(out)

    ref = reference_forward(x, params, negative_slope)
    assert out.shape == (batch, output_size)
    assert jnp.allclose(out, ref, atol=1e-5, rtol=1e-5), "mismatch vs reference"

    print("KERNEL_OK")
</pallas_src>

<mosaic_0001>
module attributes {stable_mosaic.version = 11 : i64} {
  func.func @mlp_kernel(%arg0: i32, %arg1: memref<8x128xf32, #tpu.memory_space<vmem>>, %arg2: memref<5x128x128xf32, #tpu.memory_space<vmem>>, %arg3: memref<5x128xf32, #tpu.memory_space<vmem>>, %arg4: memref<8x128xf32, #tpu.memory_space<vmem>>) attributes {dimension_semantics = [#tpu.dimension_semantics<parallel>], iteration_bounds = array<i64: 1>, scalar_prefetch = 0 : i64, scratch_operands = 0 : i64, tpu.core_type = #tpu.core_type<tc>, window_params = [{transform_indices = @transform_0, window_bounds = array<i64: 8, 128>}, {pipeline_mode = #tpu.pipeline_mode<synchronous>, transform_indices = @transform_1, window_bounds = array<i64: 5, 128, 128>}, {pipeline_mode = #tpu.pipeline_mode<synchronous>, transform_indices = @transform_2, window_bounds = array<i64: 5, 128>}, {transform_indices = @transform_3, window_bounds = array<i64: 8, 128>}]} {
    %c0 = arith.constant 0 : index
    %c0_0 = arith.constant 0 : index
    %0 = vector.load %arg1[%c0, %c0_0] : memref<8x128xf32, #tpu.memory_space<vmem>>, vector<8x128xf32>
    %c0_1 = arith.constant 0 : index
    %c0_2 = arith.constant 0 : index
    %c0_3 = arith.constant 0 : index
    %1 = vector.load %arg2[%c0_1, %c0_2, %c0_3] : memref<5x128x128xf32, #tpu.memory_space<vmem>>, vector<1x128x128xf32>
    %2 = vector.shape_cast %1 : vector<1x128x128xf32> to vector<128x128xf32>
    %c0_4 = arith.constant 0 : index
    %c0_5 = arith.constant 0 : index
    %3 = vector.load %arg3[%c0_4, %c0_5] : memref<5x128xf32, #tpu.memory_space<vmem>>, vector<1x128xf32>
    %cst = arith.constant dense<0.000000e+00> : vector<8x128xf32>
    %4 = tpu.matmul %0, %2, %cst {dimension_numbers = #tpu.dot_dimension_numbers<[1], [0], [0], [1], [0, 0, 1, 1], [], []>} : vector<8x128xf32>, vector<128x128xf32>, vector<8x128xf32> -> vector<8x128xf32>
    %5 = vector.broadcast %3 : vector<1x128xf32> to vector<8x128xf32>
    %6 = arith.addf %4, %5 : vector<8x128xf32>
    %cst_6 = arith.constant 0.000000e+00 : f32
    %7 = vector.broadcast %cst_6 : f32 to vector<8x128xf32>
    %8 = arith.cmpf oge, %6, %7 : vector<8x128xf32>
    %cst_7 = arith.constant 0.00999999977 : f32
    %9 = vector.broadcast %cst_7 : f32 to vector<8x128xf32>
    %10 = arith.mulf %9, %6 : vector<8x128xf32>
    %11 = arith.select %8, %6, %10 : vector<8x128xi1>, vector<8x128xf32>
    %c1 = arith.constant 1 : index
    %c0_8 = arith.constant 0 : index
    %c0_9 = arith.constant 0 : index
    %12 = vector.load %arg2[%c1, %c0_8, %c0_9] : memref<5x128x128xf32, #tpu.memory_space<vmem>>, vector<1x128x128xf32>
    %13 = vector.shape_cast %12 : vector<1x128x128xf32> to vector<128x128xf32>
    %c1_10 = arith.constant 1 : index
    %c0_11 = arith.constant 0 : index
    %14 = vector.load %arg3[%c1_10, %c0_11] : memref<5x128xf32, #tpu.memory_space<vmem>>, vector<1x128xf32>
    %cst_12 = arith.constant dense<0.000000e+00> : vector<8x128xf32>
    %15 = tpu.matmul %11, %13, %cst_12 {dimension_numbers = #tpu.dot_dimension_numbers<[1], [0], [0], [1], [0, 0, 1, 1], [], []>} : vector<8x128xf32>, vector<128x128xf32>, vector<8x128xf32> -> vector<8x128xf32>
    %16 = vector.broadcast %14 : vector<1x128xf32> to vector<8x128xf32>
    %17 = arith.addf %15, %16 : vector<8x128xf32>
    %cst_13 = arith.constant 0.000000e+00 : f32
    %18 = vector.broadcast %cst_13 : f32 to vector<8x128xf32>
    %19 = arith.cmpf oge, %17, %18 : vector<8x128xf32>
    %cst_14 = arith.constant 0.00999999977 : f32
    %20 = vector.broadcast %cst_14 : f32 to vector<8x128xf32>
    %21 = arith.mulf %20, %17 : vector<8x128xf32>
    %22 = arith.select %19, %17, %21 : vector<8x128xi1>, vector<8x128xf32>
    %c2 = arith.constant 2 : index
    %c0_15 = arith.constant 0 : index
    %c0_16 = arith.constant 0 : index
    %23 = vector.load %arg2[%c2, %c0_15, %c0_16] : memref<5x128x128xf32, #tpu.memory_space<vmem>>, vector<1x128x128xf32>
    %24 = vector.shape_cast %23 : vector<1x128x128xf32> to vector<128x128xf32>
    %c2_17 = arith.constant 2 : index
    %c0_18 = arith.constant 0 : index
    %25 = vector.load %arg3[%c2_17, %c0_18] : memref<5x128xf32, #tpu.memory_space<vmem>>, vector<1x128xf32>
    %cst_19 = arith.constant dense<0.000000e+00> : vector<8x128xf32>
    %26 = tpu.matmul %22, %24, %cst_19 {dimension_numbers = #tpu.dot_dimension_numbers<[1], [0], [0], [1], [0, 0, 1, 1], [], []>} : vector<8x128xf32>, vector<128x128xf32>, vector<8x128xf32> -> vector<8x128xf32>
    %27 = vector.broadcast %25 : vector<1x128xf32> to vector<8x128xf32>
    %28 = arith.addf %26, %27 : vector<8x128xf32>
    %cst_20 = arith.constant 0.000000e+00 : f32
    %29 = vector.broadcast %cst_20 : f32 to vector<8x128xf32>
    %30 = arith.cmpf oge, %28, %29 : vector<8x128xf32>
    %cst_21 = arith.constant 0.00999999977 : f32
    %31 = vector.broadcast %cst_21 : f32 to vector<8x128xf32>
    %32 = arith.mulf %31, %28 : vector<8x128xf32>
    %33 = arith.select %30, %28, %32 : vector<8x128xi1>, vector<8x128xf32>
    %c3 = arith.constant 3 : index
    %c0_22 = arith.constant 0 : index
    %c0_23 = arith.constant 0 : index
    %34 = vector.load %arg2[%c3, %c0_22, %c0_23] : memref<5x128x128xf32, #tpu.memory_space<vmem>>, vector<1x128x128xf32>
    %35 = vector.shape_cast %34 : vector<1x128x128xf32> to vector<128x128xf32>
    %c3_24 = arith.constant 3 : index
    %c0_25 = arith.constant 0 : index
    %36 = vector.load %arg3[%c3_24, %c0_25] : memref<5x128xf32, #tpu.memory_space<vmem>>, vector<1x128xf32>
    %cst_26 = arith.constant dense<0.000000e+00> : vector<8x128xf32>
    %37 = tpu.matmul %33, %35, %cst_26 {dimension_numbers = #tpu.dot_dimension_numbers<[1], [0], [0], [1], [0, 0, 1, 1], [], []>} : vector<8x128xf32>, vector<128x128xf32>, vector<8x128xf32> -> vector<8x128xf32>
    %38 = vector.broadcast %36 : vector<1x128xf32> to vector<8x128xf32>
    %39 = arith.addf %37, %38 : vector<8x128xf32>
    %cst_27 = arith.constant 0.000000e+00 : f32
    %40 = vector.broadcast %cst_27 : f32 to vector<8x128xf32>
    %41 = arith.cmpf oge, %39, %40 : vector<8x128xf32>
    %cst_28 = arith.constant 0.00999999977 : f32
    %42 = vector.broadcast %cst_28 : f32 to vector<8x128xf32>
    %43 = arith.mulf %42, %39 : vector<8x128xf32>
    %44 = arith.select %41, %39, %43 : vector<8x128xi1>, vector<8x128xf32>
    %c4 = arith.constant 4 : index
    %c0_29 = arith.constant 0 : index
    %c0_30 = arith.constant 0 : index
    %45 = vector.load %arg2[%c4, %c0_29, %c0_30] : memref<5x128x128xf32, #tpu.memory_space<vmem>>, vector<1x128x128xf32>
    %46 = vector.shape_cast %45 : vector<1x128x128xf32> to vector<128x128xf32>
    %c4_31 = arith.constant 4 : index
    %c0_32 = arith.constant 0 : index
    %47 = vector.load %arg3[%c4_31, %c0_32] : memref<5x128xf32, #tpu.memory_space<vmem>>, vector<1x128xf32>
    %cst_33 = arith.constant dense<0.000000e+00> : vector<8x128xf32>
    %48 = tpu.matmul %44, %46, %cst_33 {dimension_numbers = #tpu.dot_dimension_numbers<[1], [0], [0], [1], [0, 0, 1, 1], [], []>} : vector<8x128xf32>, vector<128x128xf32>, vector<8x128xf32> -> vector<8x128xf32>
    %49 = vector.broadcast %47 : vector<1x128xf32> to vector<8x128xf32>
    %50 = arith.addf %48, %49 : vector<8x128xf32>
    %c0_34 = arith.constant 0 : index
    %c0_35 = arith.constant 0 : index
    %51 = vector.load %arg4[%c0_34, %c0_35] : memref<8x128xf32, #tpu.memory_space<vmem>>, vector<8x128xf32>
    tpu.vector_store %arg4[%c0_34, %c0_35], %50 {strides = array<i32>} : memref<8x128xf32, #tpu.memory_space<vmem>>, vector<8x128xf32>,
    return
  }
  func.func @transform_0(%arg0: i32) -> (i32, i32) {
    %c0_i32 = arith.constant 0 : i32
    %c0_i32_0 = arith.constant 0 : i32
    return %arg0, %c0_i32 : i32, i32
  }
  func.func @transform_1(%arg0: i32) -> (i32, i32, i32) {
    %c0_i32 = arith.constant 0 : i32
    %c0_i32_0 = arith.constant 0 : i32
    %c0_i32_1 = arith.constant 0 : i32
    %c0_i32_2 = arith.constant 0 : i32
    return %c0_i32, %c0_i32_0, %c0_i32_1 : i32, i32, i32
  }
  func.func @transform_2(%arg0: i32) -> (i32, i32) {
    %c0_i32 = arith.constant 0 : i32
    %c0_i32_0 = arith.constant 0 : i32
    %c0_i32_1 = arith.constant 0 : i32
    return %c0_i32, %c0_i32_0 : i32, i32
  }
  func.func @transform_3(%arg0: i32) -> (i32, i32) {
    %c0_i32 = arith.constant 0 : i32
    %c0_i32_0 = arith.constant 0 : i32
    return %arg0, %c0_i32 : i32, i32
  }
}

</mosaic_0001>

<llo_original>
// kernel: tpu_custom_call.1
$region0: #{tpu_custom_call.1}
  #allocation0 [shape = 'u32[]', space=smem, size = 0x4, offset = 0x4, fixed_abs, tag = 'smem constant byte address 0x4 - core index']
  #allocation1 [shape = 'u32[144,128]{1,0:T(1,128)}', space=vmem, size = 0x12000, scoped, tag = 'internal scratch']
  %s0 = inlined_call_operand.hbm [shape: f32[8,128], index: 0, kind: input, shape index: {}]
  %s1 = inlined_call_operand.hbm [shape: f32[5,128,128], index: 1, kind: input, shape index: {}]
  %s2 = inlined_call_operand.hbm [shape: f32[5,128], index: 2, kind: input, shape index: {}]
  %s3 = inlined_call_operand.hbm [shape: f32[8,128], index: 3, kind: output, shape index: {}]
  %s4 = sld [smem:[#allocation0]]
  $region34: #{tpu_custom_call.1} parent=0
    _
  %s6 = ssub.s32 1, %s4
  %s7 = scalar_select 0, %s6, %s4
  $region1: #{tpu_custom_call.1} parent=0
    #allocation2 [shape = 'u8[4096]{0}', space=vmem, size = 0x1000, scoped, tag = 'input window, operand 0, single buffered']
    #allocation3 [shape = 's32[1]{0}', space=sflag, size = 0x4, scoped, tag = 'scoped memory for tpu_custom_call.1']
    #allocation4 [shape = 's32[1]{0}', space=sflag, size = 0x4, scoped, tag = 'scoped memory for tpu_custom_call.1']
    #allocation5 [shape = 'u8[327680]{0}', space=vmem, size = 0x50000, scoped, tag = 'input window, operand 1, single buffered']
    #allocation6 [shape = 's32[1]{0}', space=sflag, size = 0x4, scoped, tag = 'scoped memory for tpu_custom_call.1']
    #allocation7 [shape = 'u8[4096]{0}', space=vmem, size = 0x1000, scoped, tag = 'input window, operand 2, single buffered']
    #allocation8 [shape = 'u8[4096]{0}', space=vmem, size = 0x1000, scoped, tag = 'output window, operand 0, single buffered']
    %8 = vsyncpa [#allocation3], 0
    %9 = vsyncpa [#allocation6], 0
    %10 = vsyncpa [#allocation4], 0
    // Predicated region
    $region2: #{tpu_custom_call.1} parent=1 // pred_check
      _
    $region3: #{tpu_custom_call.1} parent=1 // pred_check_branch
      %12 = sbr.rel (0) target = $region5
    $region4: #{tpu_custom_call.1} parent=1 // pred_region
      %s14 = ssub.s32 128, 128
      %15 = vsyncadd [#allocation3], %s14
      %s17 = sshll.u32 [#allocation2], 4
      %s18 = int_to_ptr.vmem [resolvable:$true] %s17
      %20 = dma.hbm_to_vmem [thread:$0]  %s0, 128, %s18, [#allocation3]
    $region5: #{tpu_custom_call.1} parent=1 // pred_fallthru
      _
    // Predicated region
    $region6: #{tpu_custom_call.1} parent=1 // pred_check
      _
    $region7: #{tpu_custom_call.1} parent=1 // pred_check_branch
      %22 = sbr.rel (0) target = $region9
    $region8: #{tpu_custom_call.1} parent=1 // pred_region
      %s24 = ssub.s32 10240, 10240
      %25 = vsyncadd [#allocation6], %s24
      %s26 = sshll.u32 [#allocation5], 4
      %s27 = int_to_ptr.vmem [resolvable:$true] %s26
      %32 = dma.hbm_to_vmem [thread:$0]  %s1, 10240, %s27, [#allocation6], 128, 128, 8
    $region9: #{tpu_custom_call.1} parent=1 // pred_fallthru
      _
    // Predicated region
    $region10: #{tpu_custom_call.1} parent=1 // pred_check
      _
    $region11: #{tpu_custom_call.1} parent=1 // pred_check_branch
      %34 = sbr.rel (0) target = $region13
    $region12: #{tpu_custom_call.1} parent=1 // pred_region
      %s36 = ssub.s32 128, 128
      %37 = vsyncadd [#allocation6], %s36
      %s39 = sshll.u32 [#allocation7], 4
      %s40 = int_to_ptr.vmem [resolvable:$true] %s39
      %42 = dma.hbm_to_vmem [thread:$0]  %s2, 128, %s40, [#allocation6]
    $region13: #{tpu_custom_call.1} parent=1 // pred_fallthru
      _
    // Predicated region
    $region14: #{tpu_custom_call.1} parent=1 // pred_check
      _
    $region15: #{tpu_custom_call.1} parent=1 // pred_check_branch
      %44 = sbr.rel (0) target = $region17
    $region16: #{tpu_custom_call.1} parent=1 // pred_region
      %45 = dma.done [#allocation3], 128
    $region17: #{tpu_custom_call.1} parent=1 // pred_fallthru
      _
    // Predicated region
    $region18: #{tpu_custom_call.1} parent=1 // pred_check
      _
    $region19: #{tpu_custom_call.1} parent=1 // pred_check_branch
      %47 = sbr.rel (0) target = $region21
    $region20: #{tpu_custom_call.1} parent=1 // pred_region
      %48 = dma.done [#allocation6], 10240
    $region21: #{tpu_custom_call.1} parent=1 // pred_fallthru
      _
    // Predicated region
    $region22: #{tpu_custom_call.1} parent=1 // pred_check
      _
    $region23: #{tpu_custom_call.1} parent=1 // pred_check_branch
      %50 = sbr.rel (0) target = $region25
    $region24: #{tpu_custom_call.1} parent=1 // pred_region
      %51 = dma.done [#allocation6], 128
    $region25: #{tpu_custom_call.1} parent=1 // pred_fallthru
      _
    %v52 = vld [vmem:[#allocation2] sm:$0xff]
    %v53 = vld [vmem:[#allocation5] sm:$0xff]
    %v54 = vld [vmem:[#allocation5 + $0x8] sm:$0xff]
    %v55 = vld [vmem:[#allocation5 + $0x10] sm:$0xff]
    %v56 = vld [vmem:[#allocation5 + $0x18] sm:$0xff]
    %v57 = vld [vmem:[#allocation5 + $0x20] sm:$0xff]
    %v58 = vld [vmem:[#allocation5 + $0x28] sm:$0xff]
    %v59 = vld [vmem:[#allocation5 + $0x30] sm:$0xff]
    %v60 = vld [vmem:[#allocation5 + $0x38] sm:$0xff]
    %v61 = vld [vmem:[#allocation5 + $0x40] sm:$0xff]
    %v62 = vld [vmem:[#allocation5 + $0x48] sm:$0xff]
    %v63 = vld [vmem:[#allocation5 + $0x50] sm:$0xff]
    %v64 = vld [vmem:[#allocation5 + $0x58] sm:$0xff]
    %v65 = vld [vmem:[#allocation5 + $0x60] sm:$0xff]
    %v66 = vld [vmem:[#allocation5 + $0x68] sm:$0xff]
    %v67 = vld [vmem:[#allocation5 + $0x70] sm:$0xff]
    %v68 = vld [vmem:[#allocation5 + $0x78] sm:$0xff]
    %v69 = vld [vmem:[#allocation7] sm:$0x1]
    %v70 = vlaneseq
    %v71 = vshrl.u32 %v70, 7
    %v72 = vsub.s32 0, %v71
    %v73 = vrot.slane %v69, %v72
    %74 = vmatprep.subr.mxu0 0.0
    %75 = vmatpush1.msra.mxu0 %v68
    %76 = vmatprep.subr.mxu0 0.0
    %77 = vmatpush1.msra.mxu0 %v67
    %78 = vmatprep.subr.mxu0 0.0
    %79 = vmatpush1.msra.mxu0 %v66
    %80 = vmatprep.subr.mxu0 0.0
    %81 = vmatpush1.msra.mxu0 %v65
    %82 = vmatprep.subr.mxu0 0.0
    %83 = vmatpush1.msra.mxu0 %v64
    %84 = vmatprep.subr.mxu0 0.0
    %85 = vmatpush1.msra.mxu0 %v63
    %86 = vmatprep.subr.mxu0 0.0
    %87 = vmatpush1.msra.mxu0 %v62
    %88 = vmatprep.subr.mxu0 0.0
    %89 = vmatpush1.msra.mxu0 %v61
    %90 = vmatprep.subr.mxu0 0.0
    %91 = vmatpush1.msra.mxu0 %v60
    %92 = vmatprep.subr.mxu0 0.0
    %93 = vmatpush1.msra.mxu0 %v59
    %94 = vmatprep.subr.mxu0 0.0
    %95 = vmatpush1.msra.mxu0 %v58
    %96 = vmatprep.subr.mxu0 0.0
    %97 = vmatpush1.msra.mxu0 %v57
    %98 = vmatprep.subr.mxu0 0.0
    %99 = vmatpush1.msra.mxu0 %v56
    %100 = vmatprep.subr.mxu0 0.0
    %101 = vmatpush1.msra.mxu0 %v55
    %102 = vmatprep.subr.mxu0 0.0
    %103 = vmatpush1.msra.mxu0 %v54
    %104 = vmatprep.subr.mxu0 0.0
    %105 = vmatpush1.msra.mxu0 %v53
    %106 = vmatprep.subr.mxu0 0.0
    %107 = vmatpush2.msra.mxu0 0.0
    %108 = vmatprep.subr.mxu0 0.0
    %109 = vmatpush2.msra.mxu0 0.0
    %110 = vmatprep.subr.mxu0 0.0
    %111 = vmatpush2.msra.mxu0 0.0
    %112 = vmatprep.subr.mxu0 0.0
    %113 = vmatpush2.msra.mxu0 0.0
    %114 = vmatprep.subr.mxu0 0.0
    %115 = vmatpush2.msra.mxu0 0.0
    %116 = vmatprep.subr.mxu0 0.0
    %117 = vmatpush2.msra.mxu0 0.0
    %118 = vmatprep.subr.mxu0 0.0
    %119 = vmatpush2.msra.mxu0 0.0
    %120 = vmatprep.subr.mxu0 0.0
    %121 = vmatpush2.msra.mxu0 0.0
    %122 = vmatprep.subr.mxu0 0.0
    %123 = vmatpush2.msra.mxu0 0.0
    %124 = vmatprep.subr.mxu0 0.0
    %125 = vmatpush2.msra.mxu0 0.0
    %126 = vmatprep.subr.mxu0 0.0
    %127 = vmatpush2.msra.mxu0 0.0
    %128 = vmatprep.subr.mxu0 0.0
    %129 = vmatpush2.msra.mxu0 0.0
    %130 = vmatprep.subr.mxu0 0.0
    %131 = vmatpush2.msra.mxu0 0.0
    %132 = vmatprep.subr.mxu0 0.0
    %133 = vmatpush2.msra.mxu0 0.0
    %134 = vmatprep.subr.mxu0 0.0
    %135 = vmatpush2.msra.mxu0 0.0
    %136 = vmatprep.subr.mxu0 0.0
    %137 = vmatpush2.msra.mxu0 0.0
    %138 = vmatprep.mubr.f32.mxu0 0.0
    %139 = vmatmul.mubr.f32.gmra.mxu0 %v52
    %v140 = vpop.f32.mrf.mxu0
    %v141 = vadd.f32 %v73, %v140
    %v142 = vpop.f32.mrf.mxu0
    %143 = vdwg.mxu0
    %vm144 = vcmp.ge.f32.partialorder %v141, 0.0
    %v145 = vmul.f32 %v141, 0.01
    %v146 = vsel %vm144, %v141, %v145
    %s147 = scalar_lea.vmem [#allocation5], 128
    %v148 = vld [vmem:[%s147] sm:$0xff]
    %v149 = vld [vmem:[%s147 + $0x8] sm:$0xff]
    %v150 = vld [vmem:[%s147 + $0x10] sm:$0xff]
    %v151 = vld [vmem:[%s147 + $0x18] sm:$0xff]
    %v152 = vld [vmem:[%s147 + $0x20] sm:$0xff]
    %v153 = vld [vmem:[%s147 + $0x28] sm:$0xff]
    %v154 = vld [vmem:[%s147 + $0x30] sm:$0xff]
    %v155 = vld [vmem:[%s147 + $0x38] sm:$0xff]
    %v156 = vld [vmem:[%s147 + $0x40] sm:$0xff]
    %v157 = vld [vmem:[%s147 + $0x48] sm:$0xff]
    %v158 = vld [vmem:[%s147 + $0x50] sm:$0xff]
    %v159 = vld [vmem:[%s147 + $0x58] sm:$0xff]
    %v160 = vld [vmem:[%s147 + $0x60] sm:$0xff]
    %v161 = vld [vmem:[%s147 + $0x68] sm:$0xff]
    %v162 = vld [vmem:[%s147 + $0x70] sm:$0xff]
    %v163 = vld [vmem:[%s147 + $0x78] sm:$0xff]
    %v164 = vld [vmem:[#allocation7 + $0x1] sm:$0x1]
    %v165 = vlaneseq
    %v166 = vshrl.u32 %v165, 7
    %v167 = vsub.s32 0, %v166
    %v168 = vrot.slane %v164, %v167
    %169 = vmatprep.subr.mxu0 0.0
    %170 = vmatpush1.msra.mxu0 %v163
    %171 = vmatprep.subr.mxu0 0.0
    %172 = vmatpush1.msra.mxu0 %v162
    %173 = vmatprep.subr.mxu0 0.0
    %174 = vmatpush1.msra.mxu0 %v161
    %175 = vmatprep.subr.mxu0 0.0
    %176 = vmatpush1.msra.mxu0 %v160
    %177 = vmatprep.subr.mxu0 0.0
    %178 = vmatpush1.msra.mxu0 %v159
    %179 = vmatprep.subr.mxu0 0.0
    %180 = vmatpush1.msra.mxu0 %v158
    %181 = vmatprep.subr.mxu0 0.0
    %182 = vmatpush1.msra.mxu0 %v157
    %183 = vmatprep.subr.mxu0 0.0
    %184 = vmatpush1.msra.mxu0 %v156
    %185 = vmatprep.subr.mxu0 0.0
    %186 = vmatpush1.msra.mxu0 %v155
    %187 = vmatprep.subr.mxu0 0.0
    %188 = vmatpush1.msra.mxu0 %v154
    %189 = vmatprep.subr.mxu0 0.0
    %190 = vmatpush1.msra.mxu0 %v153
    %191 = vmatprep.subr.mxu0 0.0
    %192 = vmatpush1.msra.mxu0 %v152
    %193 = vmatprep.subr.mxu0 0.0
    %194 = vmatpush1.msra.mxu0 %v151
    %195 = vmatprep.subr.mxu0 0.0
    %196 = vmatpush1.msra.mxu0 %v150
    %197 = vmatprep.subr.mxu0 0.0
    %198 = vmatpush1.msra.mxu0 %v149
    %199 = vmatprep.subr.mxu0 0.0
    %200 = vmatpush1.msra.mxu0 %v148
    %201 = vmatprep.subr.mxu0 0.0
    %202 = vmatpush2.msra.mxu0 0.0
    %203 = vmatprep.subr.mxu0 0.0
    %204 = vmatpush2.msra.mxu0 0.0
    %205 = vmatprep.subr.mxu0 0.0
    %206 = vmatpush2.msra.mxu0 0.0
    %207 = vmatprep.subr.mxu0 0.0
    %208 = vmatpush2.msra.mxu0 0.0
    %209 = vmatprep.subr.mxu0 0.0
    %210 = vmatpush2.msra.mxu0 0.0
    %211 = vmatprep.subr.mxu0 0.0
    %212 = vmatpush2.msra.mxu0 0.0
    %213 = vmatprep.subr.mxu0 0.0
    %214 = vmatpush2.msra.mxu0 0.0
    %215 = vmatprep.subr.mxu0 0.0
    %216 = vmatpush2.msra.mxu0 0.0
    %217 = vmatprep.subr.mxu0 0.0
    %218 = vmatpush2.msra.mxu0 0.0
    %219 = vmatprep.subr.mxu0 0.0
    %220 = vmatpush2.msra.mxu0 0.0
    %221 = vmatprep.subr.mxu0 0.0
    %222 = vmatpush2.msra.mxu0 0.0
    %223 = vmatprep.subr.mxu0 0.0
    %224 = vmatpush2.msra.mxu0 0.0
    %225 = vmatprep.subr.mxu0 0.0
    %226 = vmatpush2.msra.mxu0 0.0
    %227 = vmatprep.subr.mxu0 0.0
    %228 = vmatpush2.msra.mxu0 0.0
    %229 = vmatprep.subr.mxu0 0.0
    %230 = vmatpush2.msra.mxu0 0.0
    %231 = vmatprep.subr.mxu0 0.0
    %232 = vmatpush2.msra.mxu0 0.0
    %233 = vmatprep.mubr.f32.mxu0 0.0
    %234 = vmatmul.mubr.f32.gmra.mxu0 %v146
    %v235 = vpop.f32.mrf.mxu0
    %v236 = vadd.f32 %v168, %v235
    %v237 = vpop.f32.mrf.mxu0
    %238 = vdwg.mxu0
    %vm239 = vcmp.ge.f32.partialorder %v236, 0.0
    %v240 = vmul.f32 %v236, 0.01
    %v241 = vsel %vm239, %v236, %v240
    %s242 = scalar_lea.vmem [#allocation5], 256
    %v243 = vld [vmem:[%s242] sm:$0xff]
    %v244 = vld [vmem:[%s242 + $0x8] sm:$0xff]
    %v245 = vld [vmem:[%s242 + $0x10] sm:$0xff]
    %v246 = vld [vmem:[%s242 + $0x18] sm:$0xff]
    %v247 = vld [vmem:[%s242 + $0x20] sm:$0xff]
    %v248 = vld [vmem:[%s242 + $0x28] sm:$0xff]
    %v249 = vld [vmem:[%s242 + $0x30] sm:$0xff]
    %v250 = vld [vmem:[%s242 + $0x38] sm:$0xff]
    %v251 = vld [vmem:[%s242 + $0x40] sm:$0xff]
    %v252 = vld [vmem:[%s242 + $0x48] sm:$0xff]
    %v253 = vld [vmem:[%s242 + $0x50] sm:$0xff]
    %v254 = vld [vmem:[%s242 + $0x58] sm:$0xff]
    %v255 = vld [vmem:[%s242 + $0x60] sm:$0xff]
    %v256 = vld [vmem:[%s242 + $0x68] sm:$0xff]
    %v257 = vld [vmem:[%s242 + $0x70] sm:$0xff]
    %v258 = vld [vmem:[%s242 + $0x78] sm:$0xff]
    %v259 = vld [vmem:[#allocation7 + $0x2] sm:$0x1]
    %v260 = vlaneseq
    %v261 = vshrl.u32 %v260, 7
    %v262 = vsub.s32 0, %v261
    %v263 = vrot.slane %v259, %v262
    %264 = vmatprep.subr.mxu0 0.0
    %265 = vmatpush1.msra.mxu0 %v258
    %266 = vmatprep.subr.mxu0 0.0
    %267 = vmatpush1.msra.mxu0 %v257
    %268 = vmatprep.subr.mxu0 0.0
    %269 = vmatpush1.msra.mxu0 %v256
    %270 = vmatprep.subr.mxu0 0.0
    %271 = vmatpush1.msra.mxu0 %v255
    %272 = vmatprep.subr.mxu0 0.0
    %273 = vmatpush1.msra.mxu0 %v254
    %274 = vmatprep.subr.mxu0 0.0
    %275 = vmatpush1.msra.mxu0 %v253
    %276 = vmatprep.subr.mxu0 0.0
    %277 = vmatpush1.msra.mxu0 %v252
    %278 = vmatprep.subr.mxu0 0.0
    %279 = vmatpush1.msra.mxu0 %v251
    %280 = vmatprep.subr.mxu0 0.0
    %281 = vmatpush1.msra.mxu0 %v250
    %282 = vmatprep.subr.mxu0 0.0
    %283 = vmatpush1.msra.mxu0 %v249
    %284 = vmatprep.subr.mxu0 0.0
    %285 = vmatpush1.msra.mxu0 %v248
    %286 = vmatprep.subr.mxu0 0.0
    %287 = vmatpush1.msra.mxu0 %v247
    %288 = vmatprep.subr.mxu0 0.0
    %289 = vmatpush1.msra.mxu0 %v246
    %290 = vmatprep.subr.mxu0 0.0
    %291 = vmatpush1.msra.mxu0 %v245
    %292 = vmatprep.subr.mxu0 0.0
    %293 = vmatpush1.msra.mxu0 %v244
    %294 = vmatprep.subr.mxu0 0.0
    %295 = vmatpush1.msra.mxu0 %v243
    %296 = vmatprep.subr.mxu0 0.0
    %297 = vmatpush2.msra.mxu0 0.0
    %298 = vmatprep.subr.mxu0 0.0
    %299 = vmatpush2.msra.mxu0 0.0
    %300 = vmatprep.subr.mxu0 0.0
    %301 = vmatpush2.msra.mxu0 0.0
    %302 = vmatprep.subr.mxu0 0.0
    %303 = vmatpush2.msra.mxu0 0.0
    %304 = vmatprep.subr.mxu0 0.0
    %305 = vmatpush2.msra.mxu0 0.0
    %306 = vmatprep.subr.mxu0 0.0
    %307 = vmatpush2.msra.mxu0 0.0
    %308 = vmatprep.subr.mxu0 0.0
    %309 = vmatpush2.msra.mxu0 0.0
    %310 = vmatprep.subr.mxu0 0.0
    %311 = vmatpush2.msra.mxu0 0.0
    %312 = vmatprep.subr.mxu0 0.0
    %313 = vmatpush2.msra.mxu0 0.0
    %314 = vmatprep.subr.mxu0 0.0
    %315 = vmatpush2.msra.mxu0 0.0
    %316 = vmatprep.subr.mxu0 0.0
    %317 = vmatpush2.msra.mxu0 0.0
    %318 = vmatprep.subr.mxu0 0.0
    %319 = vmatpush2.msra.mxu0 0.0
    %320 = vmatprep.subr.mxu0 0.0
    %321 = vmatpush2.msra.mxu0 0.0
    %322 = vmatprep.subr.mxu0 0.0
    %323 = vmatpush2.msra.mxu0 0.0
    %324 = vmatprep.subr.mxu0 0.0
    %325 = vmatpush2.msra.mxu0 0.0
    %326 = vmatprep.subr.mxu0 0.0
    %327 = vmatpush2.msra.mxu0 0.0
    %328 = vmatprep.mubr.f32.mxu0 0.0
    %329 = vmatmul.mubr.f32.gmra.mxu0 %v241
    %v330 = vpop.f32.mrf.mxu0
    %v331 = vadd.f32 %v263, %v330
    %v332 = vpop.f32.mrf.mxu0
    %333 = vdwg.mxu0
    %vm334 = vcmp.ge.f32.partialorder %v331, 0.0
    %v335 = vmul.f32 %v331, 0.01
    %v336 = vsel %vm334, %v331, %v335
    %s337 = scalar_lea.vmem [#allocation5], 384
    %v338 = vld [vmem:[%s337] sm:$0xff]
    %v339 = vld [vmem:[%s337 + $0x8] sm:$0xff]
    %v340 = vld [vmem:[%s337 + $0x10] sm:$0xff]
    %v341 = vld [vmem:[%s337 + $0x18] sm:$0xff]
    %v342 = vld [vmem:[%s337 + $0x20] sm:$0xff]
    %v343 = vld [vmem:[%s337 + $0x28] sm:$0xff]
    %v344 = vld [vmem:[%s337 + $0x30] sm:$0xff]
    %v345 = vld [vmem:[%s337 + $0x38] sm:$0xff]
    %v346 = vld [vmem:[%s337 + $0x40] sm:$0xff]
    %v347 = vld [vmem:[%s337 + $0x48] sm:$0xff]
    %v348 = vld [vmem:[%s337 + $0x50] sm:$0xff]
    %v349 = vld [vmem:[%s337 + $0x58] sm:$0xff]
    %v350 = vld [vmem:[%s337 + $0x60] sm:$0xff]
    %v351 = vld [vmem:[%s337 + $0x68] sm:$0xff]
    %v352 = vld [vmem:[%s337 + $0x70] sm:$0xff]
    %v353 = vld [vmem:[%s337 + $0x78] sm:$0xff]
    %v354 = vld [vmem:[#allocation7 + $0x3] sm:$0x1]
    %v355 = vlaneseq
    %v356 = vshrl.u32 %v355, 7
    %v357 = vsub.s32 0, %v356
    %v358 = vrot.slane %v354, %v357
    %359 = vmatprep.subr.mxu0 0.0
    %360 = vmatpush1.msra.mxu0 %v353
    %361 = vmatprep.subr.mxu0 0.0
    %362 = vmatpush1.msra.mxu0 %v352
    %363 = vmatprep.subr.mxu0 0.0
    %364 = vmatpush1.msra.mxu0 %v351
    %365 = vmatprep.subr.mxu0 0.0
    %366 = vmatpush1.msra.mxu0 %v350
    %367 = vmatprep.subr.mxu0 0.0
    %368 = vmatpush1.msra.mxu0 %v349
    %369 = vmatprep.subr.mxu0 0.0
    %370 = vmatpush1.msra.mxu0 %v348
    %371 = vmatprep.subr.mxu0 0.0
    %372 = vmatpush1.msra.mxu0 %v347
    %373 = vmatprep.subr.mxu0 0.0
    %374 = vmatpush1.msra.mxu0 %v346
    %375 = vmatprep.subr.mxu0 0.0
    %376 = vmatpush1.msra.mxu0 %v345
    %377 = vmatprep.subr.mxu0 0.0
    %378 = vmatpush1.msra.mxu0 %v344
    %379 = vmatprep.subr.mxu0 0.0
    %380 = vmatpush1.msra.mxu0 %v343
    %381 = vmatprep.subr.mxu0 0.0
    %382 = vmatpush1.msra.mxu0 %v342
    %383 = vmatprep.subr.mxu0 0.0
    %384 = vmatpush1.msra.mxu0 %v341
    %385 = vmatprep.subr.mxu0 0.0
    %386 = vmatpush1.msra.mxu0 %v340
    %387 = vmatprep.subr.mxu0 0.0
    %388 = vmatpush1.msra.mxu0 %v339
    %389 = vmatprep.subr.mxu0 0.0
    %390 = vmatpush1.msra.mxu0 %v338
    %391 = vmatprep.subr.mxu0 0.0
    %392 = vmatpush2.msra.mxu0 0.0
    %393 = vmatprep.subr.mxu0 0.0
    %394 = vmatpush2.msra.mxu0 0.0
    %395 = vmatprep.subr.mxu0 0.0
    %396 = vmatpush2.msra.mxu0 0.0
    %397 = vmatprep.subr.mxu0 0.0
    %398 = vmatpush2.msra.mxu0 0.0
    %399 = vmatprep.subr.mxu0 0.0
    %400 = vmatpush2.msra.mxu0 0.0
    %401 = vmatprep.subr.mxu0 0.0
    %402 = vmatpush2.msra.mxu0 0.0
    %403 = vmatprep.subr.mxu0 0.0
    %404 = vmatpush2.msra.mxu0 0.0
    %405 = vmatprep.subr.mxu0 0.0
    %406 = vmatpush2.msra.mxu0 0.0
    %407 = vmatprep.subr.mxu0 0.0
    %408 = vmatpush2.msra.mxu0 0.0
    %409 = vmatprep.subr.mxu0 0.0
    %410 = vmatpush2.msra.mxu0 0.0
    %411 = vmatprep.subr.mxu0 0.0
    %412 = vmatpush2.msra.mxu0 0.0
    %413 = vmatprep.subr.mxu0 0.0
    %414 = vmatpush2.msra.mxu0 0.0
    %415 = vmatprep.subr.mxu0 0.0
    %416 = vmatpush2.msra.mxu0 0.0
    %417 = vmatprep.subr.mxu0 0.0
    %418 = vmatpush2.msra.mxu0 0.0
    %419 = vmatprep.subr.mxu0 0.0
    %420 = vmatpush2.msra.mxu0 0.0
    %421 = vmatprep.subr.mxu0 0.0
    %422 = vmatpush2.msra.mxu0 0.0
    %423 = vmatprep.mubr.f32.mxu0 0.0
    %424 = vmatmul.mubr.f32.gmra.mxu0 %v336
    %v425 = vpop.f32.mrf.mxu0
    %v426 = vadd.f32 %v358, %v425
    %v427 = vpop.f32.mrf.mxu0
    %428 = vdwg.mxu0
    %vm429 = vcmp.ge.f32.partialorder %v426, 0.0
    %v430 = vmul.f32 %v426, 0.01
    %v431 = vsel %vm429, %v426, %v430
    %s432 = scalar_lea.vmem [#allocation5], 512
    %v433 = vld [vmem:[%s432] sm:$0xff]
    %v434 = vld [vmem:[%s432 + $0x8] sm:$0xff]
    %v435 = vld [vmem:[%s432 + $0x10] sm:$0xff]
    %v436 = vld [vmem:[%s432 + $0x18] sm:$0xff]
    %v437 = vld [vmem:[%s432 + $0x20] sm:$0xff]
    %v438 = vld [vmem:[%s432 + $0x28] sm:$0xff]
    %v439 = vld [vmem:[%s432 + $0x30] sm:$0xff]
    %v440 = vld [vmem:[%s432 + $0x38] sm:$0xff]
    %v441 = vld [vmem:[%s432 + $0x40] sm:$0xff]
    %v442 = vld [vmem:[%s432 + $0x48] sm:$0xff]
    %v443 = vld [vmem:[%s432 + $0x50] sm:$0xff]
    %v444 = vld [vmem:[%s432 + $0x58] sm:$0xff]
    %v445 = vld [vmem:[%s432 + $0x60] sm:$0xff]
    %v446 = vld [vmem:[%s432 + $0x68] sm:$0xff]
    %v447 = vld [vmem:[%s432 + $0x70] sm:$0xff]
    %v448 = vld [vmem:[%s432 + $0x78] sm:$0xff]
    %v449 = vld [vmem:[#allocation7 + $0x4] sm:$0x1]
    %v450 = vlaneseq
    %v451 = vshrl.u32 %v450, 7
    %v452 = vsub.s32 0, %v451
    %v453 = vrot.slane %v449, %v452
    %454 = vmatprep.subr.mxu0 0.0
    %455 = vmatpush1.msra.mxu0 %v448
    %456 = vmatprep.subr.mxu0 0.0
    %457 = vmatpush1.msra.mxu0 %v447
    %458 = vmatprep.subr.mxu0 0.0
    %459 = vmatpush1.msra.mxu0 %v446
    %460 = vmatprep.subr.mxu0 0.0
    %461 = vmatpush1.msra.mxu0 %v445
    %462 = vmatprep.subr.mxu0 0.0
    %463 = vmatpush1.msra.mxu0 %v444
    %464 = vmatprep.subr.mxu0 0.0
    %465 = vmatpush1.msra.mxu0 %v443
    %466 = vmatprep.subr.mxu0 0.0
    %467 = vmatpush1.msra.mxu0 %v442
    %468 = vmatprep.subr.mxu0 0.0
    %469 = vmatpush1.msra.mxu0 %v441
    %470 = vmatprep.subr.mxu0 0.0
    %471 = vmatpush1.msra.mxu0 %v440
    %472 = vmatprep.subr.mxu0 0.0
    %473 = vmatpush1.msra.mxu0 %v439
    %474 = vmatprep.subr.mxu0 0.0
    %475 = vmatpush1.msra.mxu0 %v438
    %476 = vmatprep.subr.mxu0 0.0
    %477 = vmatpush1.msra.mxu0 %v437
    %478 = vmatprep.subr.mxu0 0.0
    %479 = vmatpush1.msra.mxu0 %v436
    %480 = vmatprep.subr.mxu0 0.0
    %481 = vmatpush1.msra.mxu0 %v435
    %482 = vmatprep.subr.mxu0 0.0
    %483 = vmatpush1.msra.mxu0 %v434
    %484 = vmatprep.subr.mxu0 0.0
    %485 = vmatpush1.msra.mxu0 %v433
    %486 = vmatprep.subr.mxu0 0.0
    %487 = vmatpush2.msra.mxu0 0.0
    %488 = vmatprep.subr.mxu0 0.0
    %489 = vmatpush2.msra.mxu0 0.0
    %490 = vmatprep.subr.mxu0 0.0
    %491 = vmatpush2.msra.mxu0 0.0
    %492 = vmatprep.subr.mxu0 0.0
    %493 = vmatpush2.msra.mxu0 0.0
    %494 = vmatprep.subr.mxu0 0.0
    %495 = vmatpush2.msra.mxu0 0.0
    %496 = vmatprep.subr.mxu0 0.0
    %497 = vmatpush2.msra.mxu0 0.0
    %498 = vmatprep.subr.mxu0 0.0
    %499 = vmatpush2.msra.mxu0 0.0
    %500 = vmatprep.subr.mxu0 0.0
    %501 = vmatpush2.msra.mxu0 0.0
    %502 = vmatprep.subr.mxu0 0.0
    %503 = vmatpush2.msra.mxu0 0.0
    %504 = vmatprep.subr.mxu0 0.0
    %505 = vmatpush2.msra.mxu0 0.0
    %506 = vmatprep.subr.mxu0 0.0
    %507 = vmatpush2.msra.mxu0 0.0
    %508 = vmatprep.subr.mxu0 0.0
    %509 = vmatpush2.msra.mxu0 0.0
    %510 = vmatprep.subr.mxu0 0.0
    %511 = vmatpush2.msra.mxu0 0.0
    %512 = vmatprep.subr.mxu0 0.0
    %513 = vmatpush2.msra.mxu0 0.0
    %514 = vmatprep.subr.mxu0 0.0
    %515 = vmatpush2.msra.mxu0 0.0
    %516 = vmatprep.subr.mxu0 0.0
    %517 = vmatpush2.msra.mxu0 0.0
    %518 = vmatprep.mubr.f32.mxu0 0.0
    %519 = vmatmul.mubr.f32.gmra.mxu0 %v431
    %v520 = vpop.f32.mrf.mxu0
    %v521 = vadd.f32 %v453, %v520
    %v522 = vpop.f32.mrf.mxu0
    %523 = vdwg.mxu0
    %524 = vst [vmem:[#allocation8] sm:$0xff] %v521
    // Predicated region
    $region26: #{tpu_custom_call.1} parent=1 // pred_check
      _
    $region27: #{tpu_custom_call.1} parent=1 // pred_check_branch
      %526 = sbr.rel (0) target = $region29
    $region28: #{tpu_custom_call.1} parent=1 // pred_region
      %s528 = ssub.s32 128, 128
      %529 = vsyncadd [#allocation4], %s528
      %s531 = sshll.u32 [#allocation8], 4
      %s532 = int_to_ptr.vmem [resolvable:$true] %s531
      %534 = dma.vmem_to_hbm [thread:$0]  %s532, 128, %s3, [#allocation4]
    $region29: #{tpu_custom_call.1} parent=1 // pred_fallthru
      _
    // Predicated region
    $region30: #{tpu_custom_call.1} parent=1 // pred_check
      _
    $region31: #{tpu_custom_call.1} parent=1 // pred_check_branch
      %536 = sbr.rel (0) target = $region33
    $region32: #{tpu_custom_call.1} parent=1 // pred_region
      %537 = dma.done [#allocation4], 128
    $region33: #{tpu_custom_call.1} parent=1 // pred_fallthru
      _
    %538 = vsyncpa [#allocation3], 1
    %539 = vsyncpa [#allocation6], 1
    %540 = vsyncpa [#allocation4], 1

</llo_original>
